<compile_context>
chip_gen: v7x
topology: tpu7x:2x2x1
jax: 0.10.0
libtpu: 0.0.40
codegen_flags: <defaults>
</compile_context>

<pallas_src>
import functools

import jax
import jax.numpy as jnp
from jax import lax
from jax.experimental import pallas as pl
from jax.experimental.pallas import tpu as pltpu

_T1 = 0.5 / 1023.0   # merge-consistency threshold
_T2 = 4.0 / 1023.0   # upper magnitude threshold
_T3 = 1.0 / 1023.0   # lower magnitude threshold

_LANE = 128
_SUBLANE = 8
# With strip-mined temporaries the per-step VMEM footprint is dominated by the
# double-buffered in/out blocks, so 4 MiB blocks are safe on every generation.
_MAX_BLOCK_BYTES = 4 * 1024 * 1024


def _round_up(a, m):
    return (a + m - 1) // m * m


def _gradmap_kernel(x_ref, o_ref, *, img_h, img_w, w_pad, tb):
    """One grid step: tb packed image-strips, each (h_pad, k*w_pad)."""
    strip_h, bw = x_ref.shape[2], x_ref.shape[3]

    # ---- per-strip coordinates & boundary masks: computed ONCE and reused by
    # ---- every strip (they only depend on the packed layout) ---------------
    r = lax.broadcasted_iota(jnp.int32, (strip_h, bw), 0)
    c = lax.broadcasted_iota(jnp.int32, (strip_h, bw), 1) % w_pad

    row_pos = tuple(r >= d for d in (1, 2, 3))          # pull from row-d valid
    row_neg = tuple(r < img_h - d for d in (1, 2, 3))   # pull from row+d valid
    col_pos = tuple(c >= d for d in (1, 2, 3))          # pull from col-d valid
    col_neg = tuple(c < img_w - d for d in (1, 2, 3))   # pull from col+d valid
    top = r == 0
    bot = r == img_h - 1
    left = c == 0
    right = c == img_w - 1

    # value from (row-d, col) / (row, col-d); zero outside the image
    # (scipy convolve2d 'same' zero padding).  Rolls go to the XLU slot.
    def sh_r(a, d, mask):
        return jnp.where(mask, pltpu.roll(a, d % strip_h, axis=0), 0.0)

    def sh_c(a, d, mask):
        return jnp.where(mask, pltpu.roll(a, d % bw, axis=1), 0.0)

    def directional(g1, g2, g3):
        g_merge = (g1 + g2 + g3) * (1.0 / 3.0)
        a1 = jnp.abs(g1)
        keep = (jnp.abs(g_merge - g1) <= _T1) & (a1 <= _T2) & (a1 > _T3)
        return jnp.where(keep, a1, 0.0)

    def blur3(a):
        # separable 3x3 mean; cv2.blur default BORDER_REFLECT_101 per image.
        up = pltpu.roll(a, 1, axis=0)           # value from row-1
        dn = pltpu.roll(a, strip_h - 1, axis=0)  # value from row+1
        v = a + jnp.where(top, dn, up) + jnp.where(bot, up, dn)
        lf = pltpu.roll(v, 1, axis=1)            # value from col-1
        rt = pltpu.roll(v, bw - 1, axis=1)       # value from col+1
        return (v + jnp.where(left, rt, lf) + jnp.where(right, lf, rt)) * (1.0 / 9.0)

    def strip_body(s, carry):
        x = x_ref[0, s]                                   # (strip_h, bw)

        # --- gradMask ------------------------------------------------------
        gx = directional(sh_c(x, 1, col_pos[0]) - sh_c(x, -1, col_neg[0]),
                         sh_c(x, 2, col_pos[1]) - sh_c(x, -2, col_neg[1]),
                         sh_c(x, 3, col_pos[2]) - sh_c(x, -3, col_neg[2]))
        gy = directional(sh_r(x, 1, row_pos[0]) - sh_r(x, -1, row_neg[0]),
                         sh_r(x, 2, row_pos[1]) - sh_r(x, -2, row_neg[1]),
                         sh_r(x, 3, row_pos[2]) - sh_r(x, -3, row_neg[2]))
        g = jnp.maximum(gx, gy) * (1023.0 / 4.0)

        # --- directMask (structure-tensor coherence) -------------------------
        grd_x = sh_c(g, 1, col_pos[0]) - sh_c(g, -1, col_neg[0])
        grd_y = sh_r(g, 1, row_pos[0]) - sh_r(g, -1, row_neg[0])
        sxx = blur3(grd_x * grd_x)
        syy = blur3(grd_y * grd_y)
        sxy = blur3(grd_x * grd_y)
        diff = sxx - syy
        tmp = jnp.sqrt(diff * diff + 4.0 * (sxy * sxy))   # = e1 - e2
        ss = sxx + syy                                    # = e1 + e2
        direct = jnp.where(ss > 0.0,
                           tmp * pl.reciprocal(ss + 1e-16, approx=True),
                           0.0)

        # TODO(synk): lengthMask (cv2.findContours/drawContours) has no Pallas
        #             equivalent; it is treated as all-ones.
        o_ref[0, s] = jnp.clip(g * direct, 0.0, 1.0).astype(o_ref.dtype)
        return carry

    lax.fori_loop(0, tb, strip_body, 0)


def gradmap_forward(base):
    """Pallas equivalent of gradmap.forward; base is NCHW float."""
    b, n, h, w = base.shape
    num = b * n
    x = base.reshape(num, h, w).astype(jnp.float32)

    # ---- lane-dense packing: k images of padded width w_pad per 128 lanes ----
    if w >= _LANE:
        k = 1
        w_pad = _round_up(w, _LANE)
    else:
        k = _LANE // w
        k = 1 << (k.bit_length() - 1)        # largest power of 2 (divides 128)
        w_pad = _LANE // k
    h_pad = _round_up(h, _SUBLANE)
    bw = k * w_pad

    slab_bytes = h_pad * bw * 4
    n_slabs = -(-num // k)
    tb = max(1, min(n_slabs, _MAX_BLOCK_BYTES // slab_bytes))
    # TODO(synk): frames with slab_bytes >> _MAX_BLOCK_BYTES (e.g. 4K) need a
    #             row-strip + 3-row-halo grid axis to fit v7x's 64 MiB VMEM.

    group_imgs = k * tb
    num_p = _round_up(num, group_imgs)
    n_groups = num_p // group_imgs

    xp = jnp.pad(x, ((0, num_p - num), (0, h_pad - h), (0, w_pad - w)))
    # TODO(synk): this pack (and the matching unpack) is an extra HBM pass; for
    #             production, keep tensors in the packed layout across calls.
    packed = (xp.reshape(n_groups, tb, k, h_pad, w_pad)
                .transpose(0, 1, 3, 2, 4)
                .reshape(n_groups, tb, h_pad, bw))

    # VMEM budget: 2x double-buffered in + out blocks plus ~40 strip-sized live
    # temporaries/masks, with slack; capped to fit v7x's 64 MiB per TensorCore.
    block_bytes = tb * slab_bytes
    vmem_limit = 4 * block_bytes + 48 * slab_bytes + (4 << 20)
    vmem_limit = int(min(max(vmem_limit, 32 << 20), 64 << 20))

    kernel = functools.partial(_gradmap_kernel,
                               img_h=h, img_w=w, w_pad=w_pad, tb=tb)
    out_packed = pl.pallas_call(
        kernel,
        out_shape=jax.ShapeDtypeStruct((n_groups, tb, h_pad, bw), jnp.float32),
        grid=(n_groups,),
        in_specs=[pl.BlockSpec((1, tb, h_pad, bw), lambda i: (i, 0, 0, 0))],
        out_specs=pl.BlockSpec((1, tb, h_pad, bw), lambda i: (i, 0, 0, 0)),
        compiler_params=pltpu.CompilerParams(
            # TODO(synk): on v7x switch this axis to CORE_PARALLEL (and pad
            #             n_groups to a multiple of 2) to use both TensorCores.
            dimension_semantics=("parallel",),
            vmem_limit_bytes=vmem_limit),
    )(packed)

    # ---- unpack ---------------------------------------------------------------
    out = (out_packed.reshape(n_groups, tb, h_pad, k, w_pad)
           .transpose(0, 1, 3, 2, 4)
           .reshape(num_p, h_pad, w_pad)[:num, :h, :w])
    return out.reshape(b, n, h, w)


def _reference(base):
    """Pure-JAX (non-Pallas) mirror of the forward pass, for a sanity check."""
    b, n, h, w = base.shape
    imgs = base.reshape(b * n, h, w).astype(jnp.float32)

    def taps(a, k_, axis):
        # out[p] = a[p-k] - a[p+k] along `axis`, zero padded ('same' convolution)
        pad = [(0, 0)] * 3
        pad[axis] = (k_, k_)
        ap = jnp.pad(a, pad)
        size = a.shape[axis]
        lo = lax.slice_in_dim(ap, 0, size, axis=axis)
        hi = lax.slice_in_dim(ap, 2 * k_, 2 * k_ + size, axis=axis)
        return lo - hi

    def directional(g1, g2, g3):
        gm = (g1 + g2 + g3) / 3.0
        a1 = jnp.abs(g1)
        keep = (jnp.abs(gm - g1) <= _T1) & (a1 <= _T2) & (a1 > _T3)
        return jnp.where(keep, a1, 0.0)

    gx = directional(taps(imgs, 1, 2), taps(imgs, 2, 2), taps(imgs, 3, 2))
    gy = directional(taps(imgs, 1, 1), taps(imgs, 2, 1), taps(imgs, 3, 1))
    g = jnp.maximum(gx, gy) * (1023.0 / 4.0)

    grd_x = taps(g, 1, 2)
    grd_y = taps(g, 1, 1)

    def blur3(a):
        ap = jnp.pad(a, ((0, 0), (1, 1), (1, 1)), mode="reflect")  # REFLECT_101
        acc = jnp.zeros_like(a)
        for di in range(3):
            for dj in range(3):
                acc = acc + ap[:, di:di + h, dj:dj + w]
        return acc / 9.0

    sxx, syy, sxy = blur3(grd_x * grd_x), blur3(grd_y * grd_y), blur3(grd_x * grd_y)
    tmp = jnp.sqrt((sxx - syy) ** 2 + 4.0 * sxy ** 2)
    direct = tmp / (sxx + syy + 1e-16)
    return jnp.clip(g * direct, 0.0, 1.0).reshape(b, n, h, w)


if __name__ == "__main__":
    key = jax.random.PRNGKey(0)
    # Small pixel values so some gradients land inside the 1/1023 .. 4/1023 band.
    base = jax.random.uniform(key, (2, 4, 16, 16), dtype=jnp.float32) * (3.0 / 1023.0)

    out = jax.block_until_ready(gradmap_forward(base))
    assert out.shape == (2, 4, 16, 16)
    assert out.dtype == jnp.float32

    ref = jax.block_until_ready(_reference(base))
    err = float(jnp.max(jnp.abs(out - ref)))
    assert err < 1e-2, f"max abs error vs reference: {err}"
    print("KERNEL_OK")
</pallas_src>

<mosaic_0001>
module attributes {stable_mosaic.version = 11 : i64} {
  func.func @_gradmap_kernel(%arg0: i32, %arg1: memref<1x1x16x128xf32, #tpu.memory_space<vmem>>, %arg2: memref<1x1x16x128xf32, #tpu.memory_space<vmem>>) attributes {dimension_semantics = [#tpu.dimension_semantics<parallel>], iteration_bounds = array<i64: 1>, scalar_prefetch = 0 : i64, scratch_operands = 0 : i64, tpu.core_type = #tpu.core_type<tc>, window_params = [{transform_indices = @transform_0, window_bounds = array<i64: 1, 1, 16, 128>}, {transform_indices = @transform_1, window_bounds = array<i64: 1, 1, 16, 128>}]} {
    %0 = tpu.iota {dimensions = array<i32: 0>} : vector<16x128xi32>
    %1 = tpu.iota {dimensions = array<i32: 1>} : vector<16x128xi32>
    %c16_i32 = arith.constant 16 : i32
    %c0_i32 = arith.constant 0 : i32
    %2 = arith.cmpi eq, %c16_i32, %c0_i32 : i32
    %c1_i32 = arith.constant 1 : i32
    %3 = arith.select %2, %c1_i32, %c16_i32 : i32
    %4 = vector.broadcast %3 : i32 to vector<16x128xi32>
    %5 = arith.remsi %1, %4 : vector<16x128xi32>
    %c0_i32_0 = arith.constant 0 : i32
    %6 = vector.broadcast %c0_i32_0 : i32 to vector<16x128xi32>
    %7 = arith.cmpi ne, %5, %6 : vector<16x128xi32>
    %c0_i32_1 = arith.constant 0 : i32
    %8 = vector.broadcast %c0_i32_1 : i32 to vector<16x128xi32>
    %9 = arith.cmpi slt, %5, %8 : vector<16x128xi32>
    %c0_i32_2 = arith.constant 0 : i32
    %10 = arith.cmpi slt, %3, %c0_i32_2 : i32
    %11 = vector.broadcast %10 : i1 to vector<16x128xi1>
    %12 = vector.broadcast %11 : vector<16x128xi1> to vector<16x128xi1>
    %13 = arith.xori %9, %12 : vector<16x128xi1>
    %14 = arith.andi %13, %7 : vector<16x128xi1>
    %15 = vector.broadcast %3 : i32 to vector<16x128xi32>
    %16 = arith.addi %5, %15 : vector<16x128xi32>
    %17 = arith.select %14, %16, %5 : vector<16x128xi1>, vector<16x128xi32>
    %c1_i32_3 = arith.constant 1 : i32
    %18 = vector.broadcast %c1_i32_3 : i32 to vector<16x128xi32>
    %19 = arith.cmpi sge, %0, %18 : vector<16x128xi32>
    %c2_i32 = arith.constant 2 : i32
    %20 = vector.broadcast %c2_i32 : i32 to vector<16x128xi32>
    %21 = arith.cmpi sge, %0, %20 : vector<16x128xi32>
    %c3_i32 = arith.constant 3 : i32
    %22 = vector.broadcast %c3_i32 : i32 to vector<16x128xi32>
    %23 = arith.cmpi sge, %0, %22 : vector<16x128xi32>
    %c15_i32 = arith.constant 15 : i32
    %24 = vector.broadcast %c15_i32 : i32 to vector<16x128xi32>
    %25 = arith.cmpi slt, %0, %24 : vector<16x128xi32>
    %c14_i32 = arith.constant 14 : i32
    %26 = vector.broadcast %c14_i32 : i32 to vector<16x128xi32>
    %27 = arith.cmpi slt, %0, %26 : vector<16x128xi32>
    %c13_i32 = arith.constant 13 : i32
    %28 = vector.broadcast %c13_i32 : i32 to vector<16x128xi32>
    %29 = arith.cmpi slt, %0, %28 : vector<16x128xi32>
    %c1_i32_4 = arith.constant 1 : i32
    %30 = vector.broadcast %c1_i32_4 : i32 to vector<16x128xi32>
    %31 = arith.cmpi sge, %17, %30 : vector<16x128xi32>
    %c2_i32_5 = arith.constant 2 : i32
    %32 = vector.broadcast %c2_i32_5 : i32 to vector<16x128xi32>
    %33 = arith.cmpi sge, %17, %32 : vector<16x128xi32>
    %c3_i32_6 = arith.constant 3 : i32
    %34 = vector.broadcast %c3_i32_6 : i32 to vector<16x128xi32>
    %35 = arith.cmpi sge, %17, %34 : vector<16x128xi32>
    %c15_i32_7 = arith.constant 15 : i32
    %36 = vector.broadcast %c15_i32_7 : i32 to vector<16x128xi32>
    %37 = arith.cmpi slt, %17, %36 : vector<16x128xi32>
    %c14_i32_8 = arith.constant 14 : i32
    %38 = vector.broadcast %c14_i32_8 : i32 to vector<16x128xi32>
    %39 = arith.cmpi slt, %17, %38 : vector<16x128xi32>
    %c13_i32_9 = arith.constant 13 : i32
    %40 = vector.broadcast %c13_i32_9 : i32 to vector<16x128xi32>
    %41 = arith.cmpi slt, %17, %40 : vector<16x128xi32>
    %c0_i32_10 = arith.constant 0 : i32
    %42 = vector.broadcast %c0_i32_10 : i32 to vector<16x128xi32>
    %43 = arith.cmpi eq, %0, %42 : vector<16x128xi32>
    %c15_i32_11 = arith.constant 15 : i32
    %44 = vector.broadcast %c15_i32_11 : i32 to vector<16x128xi32>
    %45 = arith.cmpi eq, %0, %44 : vector<16x128xi32>
    %c0_i32_12 = arith.constant 0 : i32
    %46 = vector.broadcast %c0_i32_12 : i32 to vector<16x128xi32>
    %47 = arith.cmpi eq, %17, %46 : vector<16x128xi32>
    %c15_i32_13 = arith.constant 15 : i32
    %48 = vector.broadcast %c15_i32_13 : i32 to vector<16x128xi32>
    %49 = arith.cmpi eq, %17, %48 : vector<16x128xi32>
    %c0_i32_14 = arith.constant 0 : i32
    %c0 = arith.constant 0 : index
    %50 = arith.index_cast %c0_i32_14 : i32 to index
    %c0_15 = arith.constant 0 : index
    %c0_16 = arith.constant 0 : index
    %51 = vector.load %arg1[%c0, %50, %c0_15, %c0_16] : memref<1x1x16x128xf32, #tpu.memory_space<vmem>>, vector<1x1x16x128xf32>
    %52 = vector.shape_cast %51 : vector<1x1x16x128xf32> to vector<16x128xf32>
    %c1_i32_17 = arith.constant 1 : i32
    %53 = tpu.dynamic_rotate %52 by %c1_i32_17 dim 1 : vector<16x128xf32>, i32 -> vector<16x128xf32>
    %cst = arith.constant 0.000000e+00 : f32
    %54 = vector.broadcast %cst : f32 to vector<16x128xf32>
    %55 = arith.select %31, %53, %54 : vector<16x128xi1>, vector<16x128xf32>
    %c127_i32 = arith.constant 127 : i32
    %56 = tpu.dynamic_rotate %52 by %c127_i32 dim 1 : vector<16x128xf32>, i32 -> vector<16x128xf32>
    %cst_18 = arith.constant 0.000000e+00 : f32
    %57 = vector.broadcast %cst_18 : f32 to vector<16x128xf32>
    %58 = arith.select %37, %56, %57 : vector<16x128xi1>, vector<16x128xf32>
    %59 = arith.subf %55, %58 : vector<16x128xf32>
    %c2_i32_19 = arith.constant 2 : i32
    %60 = tpu.dynamic_rotate %52 by %c2_i32_19 dim 1 : vector<16x128xf32>, i32 -> vector<16x128xf32>
    %cst_20 = arith.constant 0.000000e+00 : f32
    %61 = vector.broadcast %cst_20 : f32 to vector<16x128xf32>
    %62 = arith.select %33, %60, %61 : vector<16x128xi1>, vector<16x128xf32>
    %c126_i32 = arith.constant 126 : i32
    %63 = tpu.dynamic_rotate %52 by %c126_i32 dim 1 : vector<16x128xf32>, i32 -> vector<16x128xf32>
    %cst_21 = arith.constant 0.000000e+00 : f32
    %64 = vector.broadcast %cst_21 : f32 to vector<16x128xf32>
    %65 = arith.select %39, %63, %64 : vector<16x128xi1>, vector<16x128xf32>
    %66 = arith.subf %62, %65 : vector<16x128xf32>
    %c3_i32_22 = arith.constant 3 : i32
    %67 = tpu.dynamic_rotate %52 by %c3_i32_22 dim 1 : vector<16x128xf32>, i32 -> vector<16x128xf32>
    %cst_23 = arith.constant 0.000000e+00 : f32
    %68 = vector.broadcast %cst_23 : f32 to vector<16x128xf32>
    %69 = arith.select %35, %67, %68 : vector<16x128xi1>, vector<16x128xf32>
    %c125_i32 = arith.constant 125 : i32
    %70 = tpu.dynamic_rotate %52 by %c125_i32 dim 1 : vector<16x128xf32>, i32 -> vector<16x128xf32>
    %cst_24 = arith.constant 0.000000e+00 : f32
    %71 = vector.broadcast %cst_24 : f32 to vector<16x128xf32>
    %72 = arith.select %41, %70, %71 : vector<16x128xi1>, vector<16x128xf32>
    %73 = arith.subf %69, %72 : vector<16x128xf32>
    %74 = arith.addf %59, %66 : vector<16x128xf32>
    %75 = arith.addf %74, %73 : vector<16x128xf32>
    %cst_25 = arith.constant 0.333333343 : f32
    %76 = vector.broadcast %cst_25 : f32 to vector<16x128xf32>
    %77 = arith.mulf %75, %76 : vector<16x128xf32>
    %78 = math.absf %59 : vector<16x128xf32>
    %79 = arith.subf %77, %59 : vector<16x128xf32>
    %80 = math.absf %79 : vector<16x128xf32>
    %cst_26 = arith.constant 4.88758553E-4 : f32
    %81 = vector.broadcast %cst_26 : f32 to vector<16x128xf32>
    %82 = arith.cmpf ole, %80, %81 : vector<16x128xf32>
    %cst_27 = arith.constant 0.00391006842 : f32
    %83 = vector.broadcast %cst_27 : f32 to vector<16x128xf32>
    %84 = arith.cmpf ole, %78, %83 : vector<16x128xf32>
    %85 = arith.andi %82, %84 : vector<16x128xi1>
    %cst_28 = arith.constant 9.77517105E-4 : f32
    %86 = vector.broadcast %cst_28 : f32 to vector<16x128xf32>
    %87 = arith.cmpf ogt, %78, %86 : vector<16x128xf32>
    %88 = arith.andi %85, %87 : vector<16x128xi1>
    %cst_29 = arith.constant 0.000000e+00 : f32
    %89 = vector.broadcast %cst_29 : f32 to vector<16x128xf32>
    %90 = arith.select %88, %78, %89 : vector<16x128xi1>, vector<16x128xf32>
    %c1_i32_30 = arith.constant 1 : i32
    %91 = tpu.dynamic_rotate %52 by %c1_i32_30 dim 0 : vector<16x128xf32>, i32 -> vector<16x128xf32>
    %cst_31 = arith.constant 0.000000e+00 : f32
    %92 = vector.broadcast %cst_31 : f32 to vector<16x128xf32>
    %93 = arith.select %19, %91, %92 : vector<16x128xi1>, vector<16x128xf32>
    %c15_i32_32 = arith.constant 15 : i32
    %94 = tpu.dynamic_rotate %52 by %c15_i32_32 dim 0 : vector<16x128xf32>, i32 -> vector<16x128xf32>
    %cst_33 = arith.constant 0.000000e+00 : f32
    %95 = vector.broadcast %cst_33 : f32 to vector<16x128xf32>
    %96 = arith.select %25, %94, %95 : vector<16x128xi1>, vector<16x128xf32>
    %97 = arith.subf %93, %96 : vector<16x128xf32>
    %c2_i32_34 = arith.constant 2 : i32
    %98 = tpu.dynamic_rotate %52 by %c2_i32_34 dim 0 : vector<16x128xf32>, i32 -> vector<16x128xf32>
    %cst_35 = arith.constant 0.000000e+00 : f32
    %99 = vector.broadcast %cst_35 : f32 to vector<16x128xf32>
    %100 = arith.select %21, %98, %99 : vector<16x128xi1>, vector<16x128xf32>
    %c14_i32_36 = arith.constant 14 : i32
    %101 = tpu.dynamic_rotate %52 by %c14_i32_36 dim 0 : vector<16x128xf32>, i32 -> vector<16x128xf32>
    %cst_37 = arith.constant 0.000000e+00 : f32
    %102 = vector.broadcast %cst_37 : f32 to vector<16x128xf32>
    %103 = arith.select %27, %101, %102 : vector<16x128xi1>, vector<16x128xf32>
    %104 = arith.subf %100, %103 : vector<16x128xf32>
    %c3_i32_38 = arith.constant 3 : i32
    %105 = tpu.dynamic_rotate %52 by %c3_i32_38 dim 0 : vector<16x128xf32>, i32 -> vector<16x128xf32>
    %cst_39 = arith.constant 0.000000e+00 : f32
    %106 = vector.broadcast %cst_39 : f32 to vector<16x128xf32>
    %107 = arith.select %23, %105, %106 : vector<16x128xi1>, vector<16x128xf32>
    %c13_i32_40 = arith.constant 13 : i32
    %108 = tpu.dynamic_rotate %52 by %c13_i32_40 dim 0 : vector<16x128xf32>, i32 -> vector<16x128xf32>
    %cst_41 = arith.constant 0.000000e+00 : f32
    %109 = vector.broadcast %cst_41 : f32 to vector<16x128xf32>
    %110 = arith.select %29, %108, %109 : vector<16x128xi1>, vector<16x128xf32>
    %111 = arith.subf %107, %110 : vector<16x128xf32>
    %112 = arith.addf %97, %104 : vector<16x128xf32>
    %113 = arith.addf %112, %111 : vector<16x128xf32>
    %cst_42 = arith.constant 0.333333343 : f32
    %114 = vector.broadcast %cst_42 : f32 to vector<16x128xf32>
    %115 = arith.mulf %113, %114 : vector<16x128xf32>
    %116 = math.absf %97 : vector<16x128xf32>
    %117 = arith.subf %115, %97 : vector<16x128xf32>
    %118 = math.absf %117 : vector<16x128xf32>
    %cst_43 = arith.constant 4.88758553E-4 : f32
    %119 = vector.broadcast %cst_43 : f32 to vector<16x128xf32>
    %120 = arith.cmpf ole, %118, %119 : vector<16x128xf32>
    %cst_44 = arith.constant 0.00391006842 : f32
    %121 = vector.broadcast %cst_44 : f32 to vector<16x128xf32>
    %122 = arith.cmpf ole, %116, %121 : vector<16x128xf32>
    %123 = arith.andi %120, %122 : vector<16x128xi1>
    %cst_45 = arith.constant 9.77517105E-4 : f32
    %124 = vector.broadcast %cst_45 : f32 to vector<16x128xf32>
    %125 = arith.cmpf ogt, %116, %124 : vector<16x128xf32>
    %126 = arith.andi %123, %125 : vector<16x128xi1>
    %cst_46 = arith.constant 0.000000e+00 : f32
    %127 = vector.broadcast %cst_46 : f32 to vector<16x128xf32>
    %128 = arith.select %126, %116, %127 : vector<16x128xi1>, vector<16x128xf32>
    %129 = arith.maximumf %90, %128 : vector<16x128xf32>
    %cst_47 = arith.constant 2.557500e+02 : f32
    %130 = vector.broadcast %cst_47 : f32 to vector<16x128xf32>
    %131 = arith.mulf %129, %130 : vector<16x128xf32>
    %c1_i32_48 = arith.constant 1 : i32
    %132 = tpu.dynamic_rotate %131 by %c1_i32_48 dim 1 : vector<16x128xf32>, i32 -> vector<16x128xf32>
    %cst_49 = arith.constant 0.000000e+00 : f32
    %133 = vector.broadcast %cst_49 : f32 to vector<16x128xf32>
    %134 = arith.select %31, %132, %133 : vector<16x128xi1>, vector<16x128xf32>
    %c127_i32_50 = arith.constant 127 : i32
    %135 = tpu.dynamic_rotate %131 by %c127_i32_50 dim 1 : vector<16x128xf32>, i32 -> vector<16x128xf32>
    %cst_51 = arith.constant 0.000000e+00 : f32
    %136 = vector.broadcast %cst_51 : f32 to vector<16x128xf32>
    %137 = arith.select %37, %135, %136 : vector<16x128xi1>, vector<16x128xf32>
    %138 = arith.subf %134, %137 : vector<16x128xf32>
    %c1_i32_52 = arith.constant 1 : i32
    %139 = tpu.dynamic_rotate %131 by %c1_i32_52 dim 0 : vector<16x128xf32>, i32 -> vector<16x128xf32>
    %cst_53 = arith.constant 0.000000e+00 : f32
    %140 = vector.broadcast %cst_53 : f32 to vector<16x128xf32>
    %141 = arith.select %19, %139, %140 : vector<16x128xi1>, vector<16x128xf32>
    %c15_i32_54 = arith.constant 15 : i32
    %142 = tpu.dynamic_rotate %131 by %c15_i32_54 dim 0 : vector<16x128xf32>, i32 -> vector<16x128xf32>
    %cst_55 = arith.constant 0.000000e+00 : f32
    %143 = vector.broadcast %cst_55 : f32 to vector<16x128xf32>
    %144 = arith.select %25, %142, %143 : vector<16x128xi1>, vector<16x128xf32>
    %145 = arith.subf %141, %144 : vector<16x128xf32>
    %146 = arith.mulf %138, %138 : vector<16x128xf32>
    %c1_i32_56 = arith.constant 1 : i32
    %147 = tpu.dynamic_rotate %146 by %c1_i32_56 dim 0 : vector<16x128xf32>, i32 -> vector<16x128xf32>
    %c15_i32_57 = arith.constant 15 : i32
    %148 = tpu.dynamic_rotate %146 by %c15_i32_57 dim 0 : vector<16x128xf32>, i32 -> vector<16x128xf32>
    %149 = arith.select %43, %148, %147 : vector<16x128xi1>, vector<16x128xf32>
    %150 = arith.addf %146, %149 : vector<16x128xf32>
    %151 = arith.select %45, %147, %148 : vector<16x128xi1>, vector<16x128xf32>
    %152 = arith.addf %150, %151 : vector<16x128xf32>
    %c1_i32_58 = arith.constant 1 : i32
    %153 = tpu.dynamic_rotate %152 by %c1_i32_58 dim 1 : vector<16x128xf32>, i32 -> vector<16x128xf32>
    %c127_i32_59 = arith.constant 127 : i32
    %154 = tpu.dynamic_rotate %152 by %c127_i32_59 dim 1 : vector<16x128xf32>, i32 -> vector<16x128xf32>
    %155 = arith.select %47, %154, %153 : vector<16x128xi1>, vector<16x128xf32>
    %156 = arith.addf %152, %155 : vector<16x128xf32>
    %157 = arith.select %49, %153, %154 : vector<16x128xi1>, vector<16x128xf32>
    %158 = arith.addf %156, %157 : vector<16x128xf32>
    %cst_60 = arith.constant 0.111111112 : f32
    %159 = vector.broadcast %cst_60 : f32 to vector<16x128xf32>
    %160 = arith.mulf %158, %159 : vector<16x128xf32>
    %161 = arith.mulf %145, %145 : vector<16x128xf32>
    %c1_i32_61 = arith.constant 1 : i32
    %162 = tpu.dynamic_rotate %161 by %c1_i32_61 dim 0 : vector<16x128xf32>, i32 -> vector<16x128xf32>
    %c15_i32_62 = arith.constant 15 : i32
    %163 = tpu.dynamic_rotate %161 by %c15_i32_62 dim 0 : vector<16x128xf32>, i32 -> vector<16x128xf32>
    %164 = arith.select %43, %163, %162 : vector<16x128xi1>, vector<16x128xf32>
    %165 = arith.addf %161, %164 : vector<16x128xf32>
    %166 = arith.select %45, %162, %163 : vector<16x128xi1>, vector<16x128xf32>
    %167 = arith.addf %165, %166 : vector<16x128xf32>
    %c1_i32_63 = arith.constant 1 : i32
    %168 = tpu.dynamic_rotate %167 by %c1_i32_63 dim 1 : vector<16x128xf32>, i32 -> vector<16x128xf32>
    %c127_i32_64 = arith.constant 127 : i32
    %169 = tpu.dynamic_rotate %167 by %c127_i32_64 dim 1 : vector<16x128xf32>, i32 -> vector<16x128xf32>
    %170 = arith.select %47, %169, %168 : vector<16x128xi1>, vector<16x128xf32>
    %171 = arith.addf %167, %170 : vector<16x128xf32>
    %172 = arith.select %49, %168, %169 : vector<16x128xi1>, vector<16x128xf32>
    %173 = arith.addf %171, %172 : vector<16x128xf32>
    %cst_65 = arith.constant 0.111111112 : f32
    %174 = vector.broadcast %cst_65 : f32 to vector<16x128xf32>
    %175 = arith.mulf %173, %174 : vector<16x128xf32>
    %176 = arith.mulf %138, %145 : vector<16x128xf32>
    %c1_i32_66 = arith.constant 1 : i32
    %177 = tpu.dynamic_rotate %176 by %c1_i32_66 dim 0 : vector<16x128xf32>, i32 -> vector<16x128xf32>
    %c15_i32_67 = arith.constant 15 : i32
    %178 = tpu.dynamic_rotate %176 by %c15_i32_67 dim 0 : vector<16x128xf32>, i32 -> vector<16x128xf32>
    %179 = arith.select %43, %178, %177 : vector<16x128xi1>, vector<16x128xf32>
    %180 = arith.addf %176, %179 : vector<16x128xf32>
    %181 = arith.select %45, %177, %178 : vector<16x128xi1>, vector<16x128xf32>
    %182 = arith.addf %180, %181 : vector<16x128xf32>
    %c1_i32_68 = arith.constant 1 : i32
    %183 = tpu.dynamic_rotate %182 by %c1_i32_68 dim 1 : vector<16x128xf32>, i32 -> vector<16x128xf32>
    %c127_i32_69 = arith.constant 127 : i32
    %184 = tpu.dynamic_rotate %182 by %c127_i32_69 dim 1 : vector<16x128xf32>, i32 -> vector<16x128xf32>
    %185 = arith.select %47, %184, %183 : vector<16x128xi1>, vector<16x128xf32>
    %186 = arith.addf %182, %185 : vector<16x128xf32>
    %187 = arith.select %49, %183, %184 : vector<16x128xi1>, vector<16x128xf32>
    %188 = arith.addf %186, %187 : vector<16x128xf32>
    %cst_70 = arith.constant 0.111111112 : f32
    %189 = vector.broadcast %cst_70 : f32 to vector<16x128xf32>
    %190 = arith.mulf %188, %189 : vector<16x128xf32>
    %191 = arith.subf %160, %175 : vector<16x128xf32>
    %192 = arith.mulf %191, %191 : vector<16x128xf32>
    %193 = arith.mulf %190, %190 : vector<16x128xf32>
    %cst_71 = arith.constant 4.000000e+00 : f32
    %194 = vector.broadcast %cst_71 : f32 to vector<16x128xf32>
    %195 = arith.mulf %194, %193 : vector<16x128xf32>
    %196 = arith.addf %192, %195 : vector<16x128xf32>
    %197 = math.sqrt %196 : vector<16x128xf32>
    %198 = arith.addf %160, %175 : vector<16x128xf32>
    %cst_72 = arith.constant 0.000000e+00 : f32
    %199 = vector.broadcast %cst_72 : f32 to vector<16x128xf32>
    %200 = arith.cmpf ogt, %198, %199 : vector<16x128xf32>
    %cst_73 = arith.constant 1.000000e-16 : f32
    %201 = vector.broadcast %cst_73 : f32 to vector<16x128xf32>
    %202 = arith.addf %198, %201 : vector<16x128xf32>
    %203 = tpu.reciprocal %202 {approx = true} : vector<16x128xf32> -> vector<16x128xf32>
    %204 = arith.mulf %197, %203 : vector<16x128xf32>
    %cst_74 = arith.constant 0.000000e+00 : f32
    %205 = vector.broadcast %cst_74 : f32 to vector<16x128xf32>
    %206 = arith.select %200, %204, %205 : vector<16x128xi1>, vector<16x128xf32>
    %207 = arith.mulf %131, %206 : vector<16x128xf32>
    %cst_75 = arith.constant 0.000000e+00 : f32
    %cst_76 = arith.constant 1.000000e+00 : f32
    %208 = vector.broadcast %cst_75 : f32 to vector<16x128xf32>
    %209 = arith.maximumf %208, %207 : vector<16x128xf32>
    %210 = vector.broadcast %cst_76 : f32 to vector<16x128xf32>
    %211 = arith.minimumf %210, %209 : vector<16x128xf32>
    %c0_77 = arith.constant 0 : index
    %212 = arith.index_cast %c0_i32_14 : i32 to index
    %c0_78 = arith.constant 0 : index
    %c0_79 = arith.constant 0 : index
    %213 = vector.load %arg2[%c0_77, %212, %c0_78, %c0_79] : memref<1x1x16x128xf32, #tpu.memory_space<vmem>>, vector<1x1x16x128xf32>
    %214 = vector.shape_cast %213 : vector<1x1x16x128xf32> to vector<16x128xf32>
    %215 = vector.shape_cast %211 : vector<16x128xf32> to vector<1x1x16x128xf32>
    tpu.vector_store %arg2[%c0_77, %212, %c0_78, %c0_79], %215 {strides = array<i32>} : memref<1x1x16x128xf32, #tpu.memory_space<vmem>>, vector<1x1x16x128xf32>,
    %c1_i32_80 = arith.constant 1 : i32
    return
  }
  func.func @transform_0(%arg0: i32) -> (i32, i32, i32, i32) {
    %c0_i32 = arith.constant 0 : i32
    %c0_i32_0 = arith.constant 0 : i32
    %c0_i32_1 = arith.constant 0 : i32
    %c0_i32_2 = arith.constant 0 : i32
    return %arg0, %c0_i32, %c0_i32_0, %c0_i32_1 : i32, i32, i32, i32
  }
  func.func @transform_1(%arg0: i32) -> (i32, i32, i32, i32) {
    %c0_i32 = arith.constant 0 : i32
    %c0_i32_0 = arith.constant 0 : i32
    %c0_i32_1 = arith.constant 0 : i32
    %c0_i32_2 = arith.constant 0 : i32
    return %arg0, %c0_i32, %c0_i32_0, %c0_i32_1 : i32, i32, i32, i32
  }
}

</mosaic_0001>

<llo_original>
// kernel: tpu_custom_call.1
$region0: #{tpu_custom_call.1}
  #allocation0 [shape = 'u32[]', space=smem, size = 0x4, offset = 0x4, fixed_abs, tag = 'smem constant byte address 0x4 - core index']
  #allocation1 [shape = 'u32[144,128]{1,0:T(1,128)}', space=vmem, size = 0x12000, scoped, tag = 'internal scratch']
  %s0 = inlined_call_operand.hbm [shape: f32[1,1,16,128], index: 0, kind: input, shape index: {}]
  %s1 = inlined_call_operand.hbm [shape: f32[1,1,16,128], index: 1, kind: output, shape index: {}]
  %s2 = sld [smem:[#allocation0]]
  $region18: #{tpu_custom_call.1} parent=0
    _
  %s4 = ssub.s32 1, %s2
  %s5 = scalar_select 0, %s4, %s2
  $region1: #{tpu_custom_call.1} parent=0
    #allocation2 [shape = 'u8[8192]{0}', space=vmem, size = 0x2000, scoped, tag = 'input window, operand 0, single buffered']
    #allocation3 [shape = 's32[1]{0}', space=sflag, size = 0x4, scoped, tag = 'scoped memory for tpu_custom_call.1']
    #allocation4 [shape = 's32[1]{0}', space=sflag, size = 0x4, scoped, tag = 'scoped memory for tpu_custom_call.1']
    #allocation5 [shape = 'u8[8192]{0}', space=vmem, size = 0x2000, scoped, tag = 'output window, operand 0, single buffered']
    %6 = vsyncpa [#allocation3], 0
    %7 = vsyncpa [#allocation4], 0
    // Predicated region
    $region2: #{tpu_custom_call.1} parent=1 // pred_check
      _
    $region3: #{tpu_custom_call.1} parent=1 // pred_check_branch
      %9 = sbr.rel (0) target = $region5
    $region4: #{tpu_custom_call.1} parent=1 // pred_region
      %s11 = ssub.s32 256, 256
      %12 = vsyncadd [#allocation3], %s11
      %s13 = sshll.u32 [#allocation2], 4
      %s14 = int_to_ptr.vmem [resolvable:$true] %s13
      %19 = dma.hbm_to_vmem [thread:$0]  %s0, 256, %s14, [#allocation3], 128, 128, 8
    $region5: #{tpu_custom_call.1} parent=1 // pred_fallthru
      _
    // Predicated region
    $region6: #{tpu_custom_call.1} parent=1 // pred_check
      _
    $region7: #{tpu_custom_call.1} parent=1 // pred_check_branch
      %21 = sbr.rel (0) target = $region9
    $region8: #{tpu_custom_call.1} parent=1 // pred_region
      %22 = dma.done [#allocation3], 256
    $region9: #{tpu_custom_call.1} parent=1 // pred_fallthru
      _
    %v23 = vlaneseq
    %v24 = vshrl.u32 %v23, 7
    %v25 = vadd.s32 %v24, 8
    %v26 = vlaneseq
    %v27 = vand.u32 %v26, 127
    %vm28 = vcmp.lt.s32.totalorder %v27, 0
    %v29 = vsub.s32 0, %v27
    %v30 = vsel %vm28, %v29, %v27
    %v31 = vshrl.u32 %v30, 4
    %v32 = vand.u32 %v30, 15
    %v33 = vsub.s32 0, %v32
    %v34 = vsel %vm28, %v33, %v32
    %vm35 = vcmp.ne.s32.totalorder %v34, 0
    %vm36 = vcmp.lt.s32.totalorder %v34, 0
    %vm37 = vmand %vm36, %vm35
    %v38 = vadd.s32 %v34, 16
    %v39 = vsel %vm37, %v38, %v34
    %vm40 = vcmp.ge.s32.totalorder %v24, 1
    %vm41 = vcmp.ge.s32.totalorder %v25, 1
    %vm42 = vcmp.ge.s32.totalorder %v24, 2
    %vm43 = vcmp.ge.s32.totalorder %v25, 2
    %vm44 = vcmp.ge.s32.totalorder %v24, 3
    %vm45 = vcmp.ge.s32.totalorder %v25, 3
    %vm46 = vcmp.lt.s32.totalorder %v24, 15
    %vm47 = vcmp.lt.s32.totalorder %v25, 15
    %vm48 = vcmp.lt.s32.totalorder %v24, 14
    %vm49 = vcmp.lt.s32.totalorder %v25, 14
    %vm50 = vcmp.lt.s32.totalorder %v24, 13
    %vm51 = vcmp.lt.s32.totalorder %v25, 13
    %vm52 = vcmp.ge.s32.totalorder %v39, 1
    %vm53 = vcmp.ge.s32.totalorder %v39, 2
    %vm54 = vcmp.ge.s32.totalorder %v39, 3
    %vm55 = vcmp.lt.s32.totalorder %v39, 15
    %vm56 = vcmp.lt.s32.totalorder %v39, 14
    %vm57 = vcmp.lt.s32.totalorder %v39, 13
    %vm58 = vcmp.eq.s32.totalorder %v24, 0
    %vm59 = vcmp.eq.s32.totalorder %v25, 0
    %vm60 = vcmp.eq.s32.totalorder %v24, 15
    %vm61 = vcmp.eq.s32.totalorder %v25, 15
    %vm62 = vcmp.eq.s32.totalorder %v39, 0
    %vm63 = vcmp.eq.s32.totalorder %v39, 15
    %v64 = vld [vmem:[#allocation2] sm:$0xff]
    %v65 = vld [vmem:[#allocation2 + $0x8] sm:$0xff]
    %66 = vrot.lane.b32.xlu0 %v64, 1
    %v67 = vpop.permute.xlu0 %66
    %68 = vrot.lane.b32.xlu0 %v65, 1
    %v69 = vpop.permute.xlu0 %68
    %v70 = vsel %vm52, %v67, 0.0
    %v71 = vsel %vm52, %v69, 0.0
    %72 = vrot.lane.b32.xlu0 %v64, 127
    %v73 = vpop.permute.xlu0 %72
    %74 = vrot.lane.b32.xlu0 %v65, 127
    %v75 = vpop.permute.xlu0 %74
    %v76 = vsel %vm55, %v73, 0.0
    %v77 = vsel %vm55, %v75, 0.0
    %v78 = vsub.f32 %v70, %v76
    %v79 = vsub.f32 %v71, %v77
    %80 = vrot.lane.b32.xlu0 %v64, 2
    %v81 = vpop.permute.xlu0 %80
    %82 = vrot.lane.b32.xlu0 %v65, 2
    %v83 = vpop.permute.xlu0 %82
    %v84 = vsel %vm53, %v81, 0.0
    %v85 = vsel %vm53, %v83, 0.0
    %86 = vrot.lane.b32.xlu0 %v64, 126
    %v87 = vpop.permute.xlu0 %86
    %88 = vrot.lane.b32.xlu0 %v65, 126
    %v89 = vpop.permute.xlu0 %88
    %v90 = vsel %vm56, %v87, 0.0
    %v91 = vsel %vm56, %v89, 0.0
    %v92 = vsub.f32 %v84, %v90
    %v93 = vsub.f32 %v85, %v91
    %94 = vrot.lane.b32.xlu0 %v64, 3
    %v95 = vpop.permute.xlu0 %94
    %96 = vrot.lane.b32.xlu0 %v65, 3
    %v97 = vpop.permute.xlu0 %96
    %v98 = vsel %vm54, %v95, 0.0
    %v99 = vsel %vm54, %v97, 0.0
    %100 = vrot.lane.b32.xlu0 %v64, 125
    %v101 = vpop.permute.xlu0 %100
    %102 = vrot.lane.b32.xlu0 %v65, 125
    %v103 = vpop.permute.xlu0 %102
    %v104 = vsel %vm57, %v101, 0.0
    %v105 = vsel %vm57, %v103, 0.0
    %v106 = vsub.f32 %v98, %v104
    %v107 = vsub.f32 %v99, %v105
    %v108 = vadd.f32 %v78, %v92
    %v109 = vadd.f32 %v79, %v93
    %v110 = vadd.f32 %v108, %v106
    %v111 = vadd.f32 %v109, %v107
    %v112 = vmul.f32 %v110, 0.33333334
    %v113 = vmul.f32 %v111, 0.33333334
    %v114 = vand.u32 2147483647, %v78
    %v115 = vand.u32 2147483647, %v79
    %v116 = vsub.f32 %v112, %v78
    %v117 = vsub.f32 %v113, %v79
    %v118 = vand.u32 2147483647, %v116
    %v119 = vand.u32 2147483647, %v117
    %vm120 = vcmp.le.f32.partialorder %v118, 0.00048875855
    %vm121 = vcmp.le.f32.partialorder %v119, 0.00048875855
    %vm122 = vcmp.le.f32.partialorder %v114, 0.0039100684
    %vm123 = vcmp.le.f32.partialorder %v115, 0.0039100684
    %vm124 = vmand %vm120, %vm122
    %vm125 = vmand %vm121, %vm123
    %vm126 = vcmp.gt.f32.partialorder %v114, 0.0009775171
    %vm127 = vcmp.gt.f32.partialorder %v115, 0.0009775171
    %vm128 = vmand %vm124, %vm126
    %vm129 = vmand %vm125, %vm127
    %v130 = vsel %vm128, %v114, 0.0
    %v131 = vsel %vm129, %v115, 0.0
    %v132 = vrot.slane %v64, 7
    %v133 = vrot.slane %v65, 7
    %vm134 = vcmp.lt.s32.totalorder %v24, 1
    %v135 = vsel %vm134, %v132, %v133
    %v136 = vsel %vm134, %v133, %v132
    %v137 = vsel %vm40, %v136, 0.0
    %v138 = vsel %vm41, %v135, 0.0
    %v139 = vrot.slane %v64, 1
    %v140 = vrot.slane %v65, 1
    %vm141 = vcmp.lt.s32.totalorder %v24, 7
    %v142 = vsel %vm141, %v139, %v140
    %v143 = vsel %vm141, %v140, %v139
    %v144 = vsel %vm46, %v142, 0.0
    %v145 = vsel %vm47, %v143, 0.0
    %v146 = vsub.f32 %v137, %v144
    %v147 = vsub.f32 %v138, %v145
    %v148 = vrot.slane %v64, 6
    %v149 = vrot.slane %v65, 6
    %vm150 = vcmp.lt.s32.totalorder %v24, 2
    %v151 = vsel %vm150, %v148, %v149
    %v152 = vsel %vm150, %v149, %v148
    %v153 = vsel %vm42, %v152, 0.0
    %v154 = vsel %vm43, %v151, 0.0
    %v155 = vrot.slane %v64, 2
    %v156 = vrot.slane %v65, 2
    %vm157 = vcmp.lt.s32.totalorder %v24, 6
    %v158 = vsel %vm157, %v155, %v156
    %v159 = vsel %vm157, %v156, %v155
    %v160 = vsel %vm48, %v158, 0.0
    %v161 = vsel %vm49, %v159, 0.0
    %v162 = vsub.f32 %v153, %v160
    %v163 = vsub.f32 %v154, %v161
    %v164 = vrot.slane %v64, 5
    %v165 = vrot.slane %v65, 5
    %vm166 = vcmp.lt.s32.totalorder %v24, 3
    %v167 = vsel %vm166, %v164, %v165
    %v168 = vsel %vm166, %v165, %v164
    %v169 = vsel %vm44, %v168, 0.0
    %v170 = vsel %vm45, %v167, 0.0
    %v171 = vrot.slane %v64, 3
    %v172 = vrot.slane %v65, 3
    %vm173 = vcmp.lt.s32.totalorder %v24, 5
    %v174 = vsel %vm173, %v171, %v172
    %v175 = vsel %vm173, %v172, %v171
    %v176 = vsel %vm50, %v174, 0.0
    %v177 = vsel %vm51, %v175, 0.0
    %v178 = vsub.f32 %v169, %v176
    %v179 = vsub.f32 %v170, %v177
    %v180 = vadd.f32 %v146, %v162
    %v181 = vadd.f32 %v147, %v163
    %v182 = vadd.f32 %v180, %v178
    %v183 = vadd.f32 %v181, %v179
    %v184 = vmul.f32 %v182, 0.33333334
    %v185 = vmul.f32 %v183, 0.33333334
    %v186 = vand.u32 2147483647, %v146
    %v187 = vand.u32 2147483647, %v147
    %v188 = vsub.f32 %v184, %v146
    %v189 = vsub.f32 %v185, %v147
    %v190 = vand.u32 2147483647, %v188
    %v191 = vand.u32 2147483647, %v189
    %vm192 = vcmp.le.f32.partialorder %v190, 0.00048875855
    %vm193 = vcmp.le.f32.partialorder %v191, 0.00048875855
    %vm194 = vcmp.le.f32.partialorder %v186, 0.0039100684
    %vm195 = vcmp.le.f32.partialorder %v187, 0.0039100684
    %vm196 = vmand %vm192, %vm194
    %vm197 = vmand %vm193, %vm195
    %vm198 = vcmp.gt.f32.partialorder %v186, 0.0009775171
    %vm199 = vcmp.gt.f32.partialorder %v187, 0.0009775171
    %vm200 = vmand %vm196, %vm198
    %vm201 = vmand %vm197, %vm199
    %v202 = vsel %vm200, %v186, 0.0
    %v203 = vsel %vm201, %v187, 0.0
    %v204 = vmax.f32 %v130, %v202
    %v205 = vmax.f32 %v131, %v203
    %v206 = vmul.f32 %v204, 255.75
    %v207 = vmul.f32 %v205, 255.75
    %208 = vrot.lane.b32.xlu0 %v206, 1
    %v209 = vpop.permute.xlu0 %208
    %210 = vrot.lane.b32.xlu0 %v207, 1
    %v211 = vpop.permute.xlu0 %210
    %v212 = vsel %vm52, %v209, 0.0
    %v213 = vsel %vm52, %v211, 0.0
    %214 = vrot.lane.b32.xlu0 %v206, 127
    %v215 = vpop.permute.xlu0 %214
    %216 = vrot.lane.b32.xlu0 %v207, 127
    %v217 = vpop.permute.xlu0 %216
    %v218 = vsel %vm55, %v215, 0.0
    %v219 = vsel %vm55, %v217, 0.0
    %v220 = vsub.f32 %v212, %v218
    %v221 = vsub.f32 %v213, %v219
    %v222 = vrot.slane %v206, 7
    %v223 = vrot.slane %v207, 7
    %v224 = vsel %vm134, %v222, %v223
    %v225 = vsel %vm134, %v223, %v222
    %v226 = vsel %vm40, %v225, 0.0
    %v227 = vsel %vm41, %v224, 0.0
    %v228 = vrot.slane %v206, 1
    %v229 = vrot.slane %v207, 1
    %v230 = vsel %vm141, %v228, %v229
    %v231 = vsel %vm141, %v229, %v228
    %v232 = vsel %vm46, %v230, 0.0
    %v233 = vsel %vm47, %v231, 0.0
    %v234 = vsub.f32 %v226, %v232
    %v235 = vsub.f32 %v227, %v233
    %v236 = vmul.f32 %v220, %v220
    %v237 = vmul.f32 %v221, %v221
    %v238 = vrot.slane %v236, 7
    %v239 = vrot.slane %v237, 7
    %v240 = vsel %vm134, %v238, %v239
    %v241 = vsel %vm134, %v239, %v238
    %v242 = vrot.slane %v236, 1
    %v243 = vrot.slane %v237, 1
    %v244 = vsel %vm141, %v242, %v243
    %v245 = vsel %vm141, %v243, %v242
    %v246 = vsel %vm58, %v244, %v241
    %v247 = vsel %vm59, %v245, %v240
    %v248 = vadd.f32 %v236, %v246
    %v249 = vadd.f32 %v237, %v247
    %v250 = vsel %vm60, %v241, %v244
    %v251 = vsel %vm61, %v240, %v245
    %v252 = vadd.f32 %v248, %v250
    %v253 = vadd.f32 %v249, %v251
    %254 = vrot.lane.b32.xlu0 %v252, 1
    %v255 = vpop.permute.xlu0 %254
    %256 = vrot.lane.b32.xlu0 %v253, 1
    %v257 = vpop.permute.xlu0 %256
    %258 = vrot.lane.b32.xlu0 %v252, 127
    %v259 = vpop.permute.xlu0 %258
    %260 = vrot.lane.b32.xlu0 %v253, 127
    %v261 = vpop.permute.xlu0 %260
    %v262 = vsel %vm62, %v259, %v255
    %v263 = vsel %vm62, %v261, %v257
    %v264 = vadd.f32 %v252, %v262
    %v265 = vadd.f32 %v253, %v263
    %v266 = vsel %vm63, %v255, %v259
    %v267 = vsel %vm63, %v257, %v261
    %v268 = vadd.f32 %v264, %v266
    %v269 = vadd.f32 %v265, %v267
    %v270 = vmul.f32 %v268, 0.11111111
    %v271 = vmul.f32 %v269, 0.11111111
    %v272 = vmul.f32 %v234, %v234
    %v273 = vmul.f32 %v235, %v235
    %v274 = vrot.slane %v272, 7
    %v275 = vrot.slane %v273, 7
    %v276 = vsel %vm134, %v274, %v275
    %v277 = vsel %vm134, %v275, %v274
    %v278 = vrot.slane %v272, 1
    %v279 = vrot.slane %v273, 1
    %v280 = vsel %vm141, %v278, %v279
    %v281 = vsel %vm141, %v279, %v278
    %v282 = vsel %vm58, %v280, %v277
    %v283 = vsel %vm59, %v281, %v276
    %v284 = vadd.f32 %v272, %v282
    %v285 = vadd.f32 %v273, %v283
    %v286 = vsel %vm60, %v277, %v280
    %v287 = vsel %vm61, %v276, %v281
    %v288 = vadd.f32 %v284, %v286
    %v289 = vadd.f32 %v285, %v287
    %290 = vrot.lane.b32.xlu0 %v288, 1
    %v291 = vpop.permute.xlu0 %290
    %292 = vrot.lane.b32.xlu0 %v289, 1
    %v293 = vpop.permute.xlu0 %292
    %294 = vrot.lane.b32.xlu0 %v288, 127
    %v295 = vpop.permute.xlu0 %294
    %296 = vrot.lane.b32.xlu0 %v289, 127
    %v297 = vpop.permute.xlu0 %296
    %v298 = vsel %vm62, %v295, %v291
    %v299 = vsel %vm62, %v297, %v293
    %v300 = vadd.f32 %v288, %v298
    %v301 = vadd.f32 %v289, %v299
    %v302 = vsel %vm63, %v291, %v295
    %v303 = vsel %vm63, %v293, %v297
    %v304 = vadd.f32 %v300, %v302
    %v305 = vadd.f32 %v301, %v303
    %v306 = vmul.f32 %v304, 0.11111111
    %v307 = vmul.f32 %v305, 0.11111111
    %v308 = vmul.f32 %v220, %v234
    %v309 = vmul.f32 %v221, %v235
    %v310 = vrot.slane %v308, 7
    %v311 = vrot.slane %v309, 7
    %v312 = vsel %vm134, %v310, %v311
    %v313 = vsel %vm134, %v311, %v310
    %v314 = vrot.slane %v308, 1
    %v315 = vrot.slane %v309, 1
    %v316 = vsel %vm141, %v314, %v315
    %v317 = vsel %vm141, %v315, %v314
    %v318 = vsel %vm58, %v316, %v313
    %v319 = vsel %vm59, %v317, %v312
    %v320 = vadd.f32 %v308, %v318
    %v321 = vadd.f32 %v309, %v319
    %v322 = vsel %vm60, %v313, %v316
    %v323 = vsel %vm61, %v312, %v317
    %v324 = vadd.f32 %v320, %v322
    %v325 = vadd.f32 %v321, %v323
    %326 = vrot.lane.b32.xlu0 %v324, 1
    %v327 = vpop.permute.xlu0 %326
    %328 = vrot.lane.b32.xlu0 %v325, 1
    %v329 = vpop.permute.xlu0 %328
    %330 = vrot.lane.b32.xlu0 %v324, 127
    %v331 = vpop.permute.xlu0 %330
    %332 = vrot.lane.b32.xlu0 %v325, 127
    %v333 = vpop.permute.xlu0 %332
    %v334 = vsel %vm62, %v331, %v327
    %v335 = vsel %vm62, %v333, %v329
    %v336 = vadd.f32 %v324, %v334
    %v337 = vadd.f32 %v325, %v335
    %v338 = vsel %vm63, %v327, %v331
    %v339 = vsel %vm63, %v329, %v333
    %v340 = vadd.f32 %v336, %v338
    %v341 = vadd.f32 %v337, %v339
    %v342 = vmul.f32 %v340, 0.11111111
    %v343 = vmul.f32 %v341, 0.11111111
    %v344 = vsub.f32 %v270, %v306
    %v345 = vsub.f32 %v271, %v307
    %v346 = vmul.f32 %v344, %v344
    %v347 = vmul.f32 %v345, %v345
    %v348 = vmul.f32 %v342, %v342
    %v349 = vmul.f32 %v343, %v343
    %v350 = vmul.f32 %v348, 4.0
    %v351 = vmul.f32 %v349, 4.0
    %v352 = vadd.f32 %v346, %v350
    %v353 = vadd.f32 %v347, %v351
    %v354 = vrsqrt.pop %v352
    %v355 = vmul.f32 %v352, %v354
    %vm356 = vcmp.eq.f32.partialorder %v352, inf
    %v357 = vsel %vm356, %v352, %v355
    %vm358 = vcmp.eq.f32.partialorder %v352, 0.0
    %v359 = vand.u32 %v352, 2147483648
    %v360 = vsel %vm358, %v359, %v357
    %v361 = vrsqrt.pop %v353
    %v362 = vmul.f32 %v353, %v361
    %vm363 = vcmp.eq.f32.partialorder %v353, inf
    %v364 = vsel %vm363, %v353, %v362
    %vm365 = vcmp.eq.f32.partialorder %v353, 0.0
    %v366 = vand.u32 %v353, 2147483648
    %v367 = vsel %vm365, %v366, %v364
    %v368 = vadd.f32 %v270, %v306
    %v369 = vadd.f32 %v271, %v307
    %vm370 = vcmp.gt.f32.partialorder %v368, 0.0
    %vm371 = vcmp.gt.f32.partialorder %v369, 0.0
    %v372 = vadd.f32 %v368, 1e-16
    %v373 = vadd.f32 %v369, 1e-16
    %v374 = vrcp.pop %v372
    %v375 = vrcp.pop %v373
    %v376 = vmul.f32 %v360, %v374
    %v377 = vmul.f32 %v367, %v375
    %v378 = vsel %vm370, %v376, 0.0
    %v379 = vsel %vm371, %v377, 0.0
    %v380 = vmul.f32 %v206, %v378
    %v381 = vmul.f32 %v207, %v379
    %v382 = vmax.f32 %v380, 0.0
    %v383 = vmax.f32 %v381, 0.0
    %v384 = vmin.f32 %v382, 1.0
    %v385 = vmin.f32 %v383, 1.0
    %386 = vst [vmem:[#allocation5] sm:$0xff] %v384
    %387 = vst [vmem:[#allocation5 + $0x8] sm:$0xff] %v385
    // Predicated region
    $region10: #{tpu_custom_call.1} parent=1 // pred_check
      _
    $region11: #{tpu_custom_call.1} parent=1 // pred_check_branch
      %389 = sbr.rel (0) target = $region13
    $region12: #{tpu_custom_call.1} parent=1 // pred_region
      %s391 = ssub.s32 256, 256
      %392 = vsyncadd [#allocation4], %s391
      %s393 = sshll.u32 [#allocation5], 4
      %s394 = int_to_ptr.vmem [resolvable:$true] %s393
      %399 = dma.vmem_to_hbm [thread:$0]  %s394, 256, %s1, [#allocation4], 128, 128, 8
    $region13: #{tpu_custom_call.1} parent=1 // pred_fallthru
      _
    // Predicated region
    $region14: #{tpu_custom_call.1} parent=1 // pred_check
      _
    $region15: #{tpu_custom_call.1} parent=1 // pred_check_branch
      %401 = sbr.rel (0) target = $region17
    $region16: #{tpu_custom_call.1} parent=1 // pred_region
      %402 = dma.done [#allocation4], 256
    $region17: #{tpu_custom_call.1} parent=1 // pred_fallthru
      _
    %403 = vsyncpa [#allocation3], 1
    %404 = vsyncpa [#allocation4], 1

</llo_original>
